<compile_context>
chip_gen: v5e
topology: v5e:2x2
jax: 0.10.0
libtpu: 0.0.40
codegen_flags: <defaults>
</compile_context>

<pallas_src>
import jax
import jax.numpy as jnp
from jax.experimental import pallas as pl
from jax.experimental.pallas import tpu as pltpu

d_model = 16
d_ff = 128
LN_EPS = 1e-5

# Row tile (lane dimension in the transposed layout).  2048 keeps the working
# set (tile + double buffers + the [d_ff, TM] f32 hidden) around ~3 MiB, well
# under the 32 MiB scoped-VMEM default on v5e/v6e/v7x.
TM_MAX = 2048


def ffn_kernel(xt_ref, w1_ref, w2_ref, o_ref):
    # xt_ref: [d_model, TM]   float32  (transposed activations: rows on lanes)
    # w1_ref: [d_ff, d_model] bfloat16 (native nn.Linear layout, resident)
    # w2_ref: [d_model, d_ff] bfloat16 (native nn.Linear layout, resident)
    x = xt_ref[...]                                      # f32, kept for residual/LN

    # Linear(d_model -> d_ff) + ReLU : bf16 operands, f32 accumulation (MXU + VPU)
    h = jnp.dot(w1_ref[...], x.astype(jnp.bfloat16),
                preferred_element_type=jnp.float32)      # [d_ff, TM]
    h = jnp.maximum(h, 0.0)

    # Linear(d_ff -> d_model) : bf16 operands, f32 accumulation (MXU)
    y = jnp.dot(w2_ref[...], h.astype(jnp.bfloat16),
                preferred_element_type=jnp.float32)      # [d_model, TM]

    # residual in f32
    y = y + x

    # LayerNorm over d_model (axis 0 here): gamma=1, beta=0, eps inside rsqrt,
    # biased variance (matches torch.nn.LayerNorm).
    mean = jnp.mean(y, axis=0, keepdims=True)
    c = y - mean
    var = jnp.mean(c * c, axis=0, keepdims=True)
    o_ref[...] = (c * jax.lax.rsqrt(var + LN_EPS)).astype(o_ref.dtype)


def _round_up(a, b):
    return (a + b - 1) // b * b


def poswise_ffn(x, w1, w2):
    """x: [batch, seq, d_model]; w1: [d_ff, d_model]; w2: [d_model, d_ff]
    (PyTorch nn.Linear weight layout [out_features, in_features])."""
    b, s, dm = x.shape
    assert dm == d_model
    assert w1.shape == (d_ff, d_model) and w2.shape == (d_model, d_ff)
    n = b * s

    # Lane-dense layout: rows -> lanes.  (Pure layout plumbing in the wrapper.)
    x_t = x.reshape(n, dm).T.astype(jnp.float32)          # [d_model, n]

    tm = min(TM_MAX, _round_up(n, 256))                   # multiple of 256
    n_pad = _round_up(n, tm)
    if n_pad != n:
        x_t = jnp.pad(x_t, ((0, 0), (0, n_pad - n)))      # zero pad is LN-safe

    # Hoisted weight casts: feed the MXU bf16 operands (cast once, not per tile).
    w1_b = w1.astype(jnp.bfloat16)                        # [d_ff, d_model]
    w2_b = w2.astype(jnp.bfloat16)                        # [d_model, d_ff]

    grid = (n_pad // tm,)
    out_t = pl.pallas_call(
        ffn_kernel,
        out_shape=jax.ShapeDtypeStruct((d_model, n_pad), x.dtype),
        grid_spec=pltpu.PrefetchScalarGridSpec(
            num_scalar_prefetch=0,
            grid=grid,
            in_specs=[
                pl.BlockSpec((d_model, tm), lambda i: (0, i)),
                pl.BlockSpec((d_ff, d_model), lambda i: (0, 0)),   # resident
                pl.BlockSpec((d_model, d_ff), lambda i: (0, 0)),   # resident
            ],
            out_specs=pl.BlockSpec((d_model, tm), lambda i: (0, i)),
        ),
        compiler_params=pltpu.CompilerParams(
            dimension_semantics=("parallel",)),            # rows independent
        cost_estimate=pl.CostEstimate(
            flops=4 * n_pad * d_model * d_ff,
            transcendentals=n_pad,
            bytes_accessed=2 * n_pad * d_model * 4 + 2 * d_ff * d_model * 2),
    )(x_t, w1_b, w2_b)

    return out_t[:, :n].T.reshape(b, s, dm)


def ref_ffn(x, w1, w2):
    """Pure-JAX reference matching the kernel numerics (bf16 matmul operands,
    f32 accumulation, f32 residual + LayerNorm)."""
    f32 = jnp.float32
    xb = x.astype(jnp.bfloat16).astype(f32)
    w1b = w1.astype(jnp.bfloat16).astype(f32)
    w2b = w2.astype(jnp.bfloat16).astype(f32)
    h = jnp.maximum(jnp.einsum("bsd,fd->bsf", xb, w1b), 0.0)
    y = jnp.einsum("bsf,df->bsd", h.astype(jnp.bfloat16).astype(f32), w2b) + x
    mu = jnp.mean(y, axis=-1, keepdims=True)
    var = jnp.mean((y - mu) ** 2, axis=-1, keepdims=True)
    return (y - mu) / jnp.sqrt(var + LN_EPS)


if __name__ == "__main__":
    key = jax.random.PRNGKey(0)
    k_x, k_x2, k_w1, k_w2 = jax.random.split(key, 4)

    # Deterministic parameter init mimicking nn.Linear's uniform(-1/sqrt(in), 1/sqrt(in))
    bound1 = 1.0 / (d_model ** 0.5)
    bound2 = 1.0 / (d_ff ** 0.5)
    w1 = jax.random.uniform(k_w1, (d_ff, d_model), jnp.float32, -bound1, bound1)
    w2 = jax.random.uniform(k_w2, (d_model, d_ff), jnp.float32, -bound2, bound2)

    # Primary small-shape check (batch=2, seq=8, d_model=16)
    batch, seq = 2, 8
    x = jax.random.normal(k_x, (batch, seq, d_model), dtype=jnp.float32)
    out = poswise_ffn(x, w1, w2)
    jax.block_until_ready(out)
    ref = ref_ffn(x, w1, w2)
    assert jnp.allclose(out, ref, atol=2e-3, rtol=2e-3), "small-shape mismatch"

    # Exercise the multi-tile grid + padding path (n = 2*1500 = 3000 rows).
    batch2, seq2 = 2, 1500
    x2 = jax.random.normal(k_x2, (batch2, seq2, d_model), dtype=jnp.float32)
    out2 = poswise_ffn(x2, w1, w2)
    jax.block_until_ready(out2)
    ref2 = ref_ffn(x2, w1, w2)
    assert jnp.allclose(out2, ref2, atol=2e-3, rtol=2e-3), "tiled-grid mismatch"

    print("KERNEL_OK")
</pallas_src>

<mosaic_0001>
module attributes {stable_mosaic.version = 11 : i64} {
  func.func @ffn_kernel(%arg0: i32, %arg1: memref<16x256xf32, #tpu.memory_space<vmem>>, %arg2: memref<128x16xbf16, #tpu.memory_space<vmem>>, %arg3: memref<16x128xbf16, #tpu.memory_space<vmem>>, %arg4: memref<16x256xf32, #tpu.memory_space<vmem>>) attributes {dimension_semantics = [#tpu.dimension_semantics<parallel>], iteration_bounds = array<i64: 1>, scalar_prefetch = 0 : i64, scratch_operands = 0 : i64, tpu.core_type = #tpu.core_type<tc>, window_params = [{transform_indices = @transform_0, window_bounds = array<i64: 16, 256>}, {pipeline_mode = #tpu.pipeline_mode<synchronous>, transform_indices = @transform_1, window_bounds = array<i64: 128, 16>}, {pipeline_mode = #tpu.pipeline_mode<synchronous>, transform_indices = @transform_2, window_bounds = array<i64: 16, 128>}, {transform_indices = @transform_3, window_bounds = array<i64: 16, 256>}]} {
    %c0 = arith.constant 0 : index
    %c0_0 = arith.constant 0 : index
    %0 = vector.load %arg1[%c0, %c0_0] : memref<16x256xf32, #tpu.memory_space<vmem>>, vector<16x256xf32>
    %c0_1 = arith.constant 0 : index
    %c0_2 = arith.constant 0 : index
    %1 = vector.load %arg2[%c0_1, %c0_2] : memref<128x16xbf16, #tpu.memory_space<vmem>>, vector<128x16xbf16>
    %2 = arith.truncf %0 : vector<16x256xf32> to vector<16x256xbf16>
    %cst = arith.constant dense<0.000000e+00> : vector<128x256xf32>
    %3 = tpu.matmul %1, %2, %cst {dimension_numbers = #tpu.dot_dimension_numbers<[1], [0], [0], [1], [0, 0, 1, 1], [], []>} : vector<128x16xbf16>, vector<16x256xbf16>, vector<128x256xf32> -> vector<128x256xf32>
    %cst_3 = arith.constant 0.000000e+00 : f32
    %4 = vector.broadcast %cst_3 : f32 to vector<128x256xf32>
    %5 = arith.maximumf %3, %4 : vector<128x256xf32>
    %c0_4 = arith.constant 0 : index
    %c0_5 = arith.constant 0 : index
    %6 = vector.load %arg3[%c0_4, %c0_5] : memref<16x128xbf16, #tpu.memory_space<vmem>>, vector<16x128xbf16>
    %7 = arith.truncf %5 : vector<128x256xf32> to vector<128x256xbf16>
    %cst_6 = arith.constant dense<0.000000e+00> : vector<16x256xf32>
    %8 = tpu.matmul %6, %7, %cst_6 {dimension_numbers = #tpu.dot_dimension_numbers<[1], [0], [0], [1], [0, 0, 1, 1], [], []>} : vector<16x128xbf16>, vector<128x256xbf16>, vector<16x256xf32> -> vector<16x256xf32>
    %9 = arith.addf %8, %0 : vector<16x256xf32>
    %cst_7 = arith.constant dense<0.000000e+00> : vector<256xf32>
    %10 = vector.multi_reduction <add>, %9, %cst_7 [0] : vector<16x256xf32> to vector<256xf32>
    %11 = vector.shape_cast %10 : vector<256xf32> to vector<1x256xf32>
    %cst_8 = arith.constant 1.600000e+01 : f32
    %12 = vector.broadcast %cst_8 : f32 to vector<1x256xf32>
    %13 = arith.divf %11, %12 : vector<1x256xf32>
    %14 = vector.broadcast %13 : vector<1x256xf32> to vector<16x256xf32>
    %15 = arith.subf %9, %14 : vector<16x256xf32>
    %16 = arith.mulf %15, %15 : vector<16x256xf32>
    %cst_9 = arith.constant dense<0.000000e+00> : vector<256xf32>
    %17 = vector.multi_reduction <add>, %16, %cst_9 [0] : vector<16x256xf32> to vector<256xf32>
    %18 = vector.shape_cast %17 : vector<256xf32> to vector<1x256xf32>
    %cst_10 = arith.constant 1.600000e+01 : f32
    %19 = vector.broadcast %cst_10 : f32 to vector<1x256xf32>
    %20 = arith.divf %18, %19 : vector<1x256xf32>
    %cst_11 = arith.constant 9.99999974E-6 : f32
    %21 = vector.broadcast %cst_11 : f32 to vector<1x256xf32>
    %22 = arith.addf %20, %21 : vector<1x256xf32>
    %23 = math.rsqrt %22 : vector<1x256xf32>
    %24 = vector.broadcast %23 : vector<1x256xf32> to vector<16x256xf32>
    %25 = arith.mulf %15, %24 : vector<16x256xf32>
    %c0_12 = arith.constant 0 : index
    %c0_13 = arith.constant 0 : index
    %26 = vector.load %arg4[%c0_12, %c0_13] : memref<16x256xf32, #tpu.memory_space<vmem>>, vector<16x256xf32>
    tpu.vector_store %arg4[%c0_12, %c0_13], %25 {strides = array<i32>} : memref<16x256xf32, #tpu.memory_space<vmem>>, vector<16x256xf32>,
    return
  }
  func.func @transform_0(%arg0: i32) -> (i32, i32) {
    %c0_i32 = arith.constant 0 : i32
    %c0_i32_0 = arith.constant 0 : i32
    return %c0_i32, %arg0 : i32, i32
  }
  func.func @transform_1(%arg0: i32) -> (i32, i32) {
    %c0_i32 = arith.constant 0 : i32
    %c0_i32_0 = arith.constant 0 : i32
    %c0_i32_1 = arith.constant 0 : i32
    return %c0_i32, %c0_i32_0 : i32, i32
  }
  func.func @transform_2(%arg0: i32) -> (i32, i32) {
    %c0_i32 = arith.constant 0 : i32
    %c0_i32_0 = arith.constant 0 : i32
    %c0_i32_1 = arith.constant 0 : i32
    return %c0_i32, %c0_i32_0 : i32, i32
  }
  func.func @transform_3(%arg0: i32) -> (i32, i32) {
    %c0_i32 = arith.constant 0 : i32
    %c0_i32_0 = arith.constant 0 : i32
    return %c0_i32, %arg0 : i32, i32
  }
}

</mosaic_0001>

<llo_original>
// kernel: tpu_custom_call.1
$region0: #{tpu_custom_call.1}
  #allocation0 [shape = 'u32[]', space=smem, size = 0x4, offset = 0x4, fixed_abs, tag = 'smem constant byte address 0x4 - core index']
  #allocation1 [shape = 'u32[72,128]{1,0:T(1,128)}', space=vmem, size = 0x9000, scoped, tag = 'internal scratch']
  %s0 = inlined_call_operand.vmem [shape: f32[16,256], index: 0, kind: input, shape index: {}]
  %s1 = inlined_call_operand.vmem [shape: bf16[128,16], index: 1, kind: input, shape index: {}]
  %s2 = inlined_call_operand.vmem [shape: bf16[16,128], index: 2, kind: input, shape index: {}]
  %s3 = inlined_call_operand.hbm [shape: f32[16,256], index: 3, kind: output, shape index: {}]
  %s4 = sld [smem:[#allocation0]]
  $region22: #{tpu_custom_call.1} parent=0
    _
  %s6 = ssub.s32 1, %s4
  %s7 = scalar_select 0, %s6, %s4
  $region1: #{tpu_custom_call.1} parent=0
    #allocation2 [shape = 'u8[16384]{0}', space=vmem, size = 0x4000, scoped, tag = 'output window, operand 0, single buffered']
    #allocation3 [shape = 's32[1]{0}', space=sflag, size = 0x4, scoped, tag = 'scoped memory for tpu_custom_call.1']
    %8 = vsyncpa [#allocation3], 0
    // Predicated region
    $region2: #{tpu_custom_call.1} parent=1 // pred_check
      _
    $region3: #{tpu_custom_call.1} parent=1 // pred_check_branch
      %10 = sbr.rel (0) target = $region5
    $region4: #{tpu_custom_call.1} parent=1 // pred_region
      _
    $region5: #{tpu_custom_call.1} parent=1 // pred_fallthru
      _
    // Predicated region
    $region6: #{tpu_custom_call.1} parent=1 // pred_check
      _
    $region7: #{tpu_custom_call.1} parent=1 // pred_check_branch
      %12 = sbr.rel (0) target = $region9
    $region8: #{tpu_custom_call.1} parent=1 // pred_region
      _
    $region9: #{tpu_custom_call.1} parent=1 // pred_fallthru
      _
    // Predicated region
    $region10: #{tpu_custom_call.1} parent=1 // pred_check
      _
    $region11: #{tpu_custom_call.1} parent=1 // pred_check_branch
      %14 = sbr.rel (0) target = $region13
    $region12: #{tpu_custom_call.1} parent=1 // pred_region
      _
    $region13: #{tpu_custom_call.1} parent=1 // pred_fallthru
      _
    %v16 = vld [vmem:[%s0] sm:$0xff]
    %v17 = vld [vmem:[%s0 + $0x8] sm:$0xff]
    %v18 = vld [vmem:[%s0 + $0x10] sm:$0xff]
    %v19 = vld [vmem:[%s0 + $0x18] sm:$0xff]
    %v20 = vld [vmem:[%s1] sm:$0xf]
    %v21 = vld [vmem:[%s1 + $0x4] sm:$0xf]
    %v22 = vld [vmem:[%s1 + $0x8] sm:$0xf]
    %v23 = vld [vmem:[%s1 + $0xc] sm:$0xf]
    %v24 = vld [vmem:[%s1 + $0x10] sm:$0xf]
    %v25 = vld [vmem:[%s1 + $0x14] sm:$0xf]
    %v26 = vld [vmem:[%s1 + $0x18] sm:$0xf]
    %v27 = vld [vmem:[%s1 + $0x1c] sm:$0xf]
    %v28 = vld [vmem:[%s1 + $0x20] sm:$0xf]
    %v29 = vld [vmem:[%s1 + $0x24] sm:$0xf]
    %v30 = vld [vmem:[%s1 + $0x28] sm:$0xf]
    %v31 = vld [vmem:[%s1 + $0x2c] sm:$0xf]
    %v32 = vld [vmem:[%s1 + $0x30] sm:$0xf]
    %v33 = vld [vmem:[%s1 + $0x34] sm:$0xf]
    %v34 = vld [vmem:[%s1 + $0x38] sm:$0xf]
    %v35 = vld [vmem:[%s1 + $0x3c] sm:$0xf]
    %v36 = vpack.c.bf16 %v18, %v16
    %v37 = vpack.c.bf16 %v19, %v17
    %v54 = vunpack.c.l.b16 %v20
    %v55 = vunpack.c.l.b16 %v21
    %v56 = vunpack.c.l.b16 %v22
    %v57 = vunpack.c.l.b16 %v23
    %v58 = vunpack.c.l.b16 %v24
    %v59 = vunpack.c.l.b16 %v25
    %v60 = vunpack.c.l.b16 %v26
    %v61 = vunpack.c.l.b16 %v27
    %v62 = vunpack.c.l.b16 %v28
    %v63 = vunpack.c.l.b16 %v29
    %v64 = vunpack.c.l.b16 %v30
    %v65 = vunpack.c.l.b16 %v31
    %v66 = vunpack.c.l.b16 %v32
    %v67 = vunpack.c.l.b16 %v33
    %v68 = vunpack.c.l.b16 %v34
    %v69 = vunpack.c.l.b16 %v35
    %v70 = vpack.c.b16 %v55, %v54
    %v71 = vpack.c.b16 %v57, %v56
    %v72 = vpack.c.b16 %v59, %v58
    %v73 = vpack.c.b16 %v61, %v60
    %v74 = vpack.c.b16 %v63, %v62
    %v75 = vpack.c.b16 %v65, %v64
    %v76 = vpack.c.b16 %v67, %v66
    %v77 = vpack.c.b16 %v69, %v68
    %vm78 = vcmask 130048
    %v80 = vsel %vm78, %v70, 0
    %v83 = vsel %vm78, %v71, 0
    %v86 = vsel %vm78, %v72, 0
    %v89 = vsel %vm78, %v73, 0
    %v92 = vsel %vm78, %v74, 0
    %v95 = vsel %vm78, %v75, 0
    %v98 = vsel %vm78, %v76, 0
    %v101 = vsel %vm78, %v77, 0
    %103 = vmatpush.bf16.msra.mxu0 0
    %104 = vmatpush.bf16.msra.mxu0 0
    %105 = vmatpush.bf16.msra.mxu0 0
    %106 = vmatpush.bf16.msra.mxu0 0
    %107 = vmatpush.bf16.msra.mxu0 0
    %108 = vmatpush.bf16.msra.mxu0 0
    %109 = vmatpush.bf16.msra.mxu0 0
    %110 = vmatpush.bf16.msra.mxu0 %v36
    %111 = vmatmul.bf16.gmra.mxu0 %v80
    %v112 = vpop.f32.mrf.mxu0
    %v113 = vadd.f32 0.0, %v112
    %v114 = vpop.f32.mrf.mxu0
    %v115 = vadd.f32 0.0, %v114
    %116 = vmatmul.bf16.gmra.mxu0 %v83
    %v117 = vpop.f32.mrf.mxu0
    %v118 = vadd.f32 0.0, %v117
    %v119 = vpop.f32.mrf.mxu0
    %v120 = vadd.f32 0.0, %v119
    %121 = vmatmul.bf16.gmra.mxu0 %v86
    %v122 = vpop.f32.mrf.mxu0
    %v123 = vadd.f32 0.0, %v122
    %v124 = vpop.f32.mrf.mxu0
    %v125 = vadd.f32 0.0, %v124
    %126 = vmatmul.bf16.gmra.mxu0 %v89
    %v127 = vpop.f32.mrf.mxu0
    %v128 = vadd.f32 0.0, %v127
    %v129 = vpop.f32.mrf.mxu0
    %v130 = vadd.f32 0.0, %v129
    %131 = vmatmul.bf16.gmra.mxu0 %v92
    %v132 = vpop.f32.mrf.mxu0
    %v133 = vadd.f32 0.0, %v132
    %v134 = vpop.f32.mrf.mxu0
    %v135 = vadd.f32 0.0, %v134
    %136 = vmatmul.bf16.gmra.mxu0 %v95
    %v137 = vpop.f32.mrf.mxu0
    %v138 = vadd.f32 0.0, %v137
    %v139 = vpop.f32.mrf.mxu0
    %v140 = vadd.f32 0.0, %v139
    %141 = vmatmul.bf16.gmra.mxu0 %v98
    %v142 = vpop.f32.mrf.mxu0
    %v143 = vadd.f32 0.0, %v142
    %v144 = vpop.f32.mrf.mxu0
    %v145 = vadd.f32 0.0, %v144
    %146 = vmatmul.bf16.gmra.mxu0 %v101
    %v147 = vpop.f32.mrf.mxu0
    %v148 = vadd.f32 0.0, %v147
    %v149 = vpop.f32.mrf.mxu0
    %v150 = vadd.f32 0.0, %v149
    %151 = vdwg.mxu0
    %152 = vmatpush.bf16.msra.mxu0 0
    %153 = vmatpush.bf16.msra.mxu0 0
    %154 = vmatpush.bf16.msra.mxu0 0
    %155 = vmatpush.bf16.msra.mxu0 0
    %156 = vmatpush.bf16.msra.mxu0 0
    %157 = vmatpush.bf16.msra.mxu0 0
    %158 = vmatpush.bf16.msra.mxu0 0
    %159 = vmatpush.bf16.msra.mxu0 %v37
    %160 = vmatmul.bf16.gmra.mxu0 %v80
    %v161 = vpop.f32.mrf.mxu0
    %v162 = vadd.f32 0.0, %v161
    %v163 = vpop.f32.mrf.mxu0
    %v164 = vadd.f32 0.0, %v163
    %165 = vmatmul.bf16.gmra.mxu0 %v83
    %v166 = vpop.f32.mrf.mxu0
    %v167 = vadd.f32 0.0, %v166
    %v168 = vpop.f32.mrf.mxu0
    %v169 = vadd.f32 0.0, %v168
    %170 = vmatmul.bf16.gmra.mxu0 %v86
    %v171 = vpop.f32.mrf.mxu0
    %v172 = vadd.f32 0.0, %v171
    %v173 = vpop.f32.mrf.mxu0
    %v174 = vadd.f32 0.0, %v173
    %175 = vmatmul.bf16.gmra.mxu0 %v89
    %v176 = vpop.f32.mrf.mxu0
    %v177 = vadd.f32 0.0, %v176
    %v178 = vpop.f32.mrf.mxu0
    %v179 = vadd.f32 0.0, %v178
    %180 = vmatmul.bf16.gmra.mxu0 %v92
    %v181 = vpop.f32.mrf.mxu0
    %v182 = vadd.f32 0.0, %v181
    %v183 = vpop.f32.mrf.mxu0
    %v184 = vadd.f32 0.0, %v183
    %185 = vmatmul.bf16.gmra.mxu0 %v95
    %v186 = vpop.f32.mrf.mxu0
    %v187 = vadd.f32 0.0, %v186
    %v188 = vpop.f32.mrf.mxu0
    %v189 = vadd.f32 0.0, %v188
    %190 = vmatmul.bf16.gmra.mxu0 %v98
    %v191 = vpop.f32.mrf.mxu0
    %v192 = vadd.f32 0.0, %v191
    %v193 = vpop.f32.mrf.mxu0
    %v194 = vadd.f32 0.0, %v193
    %195 = vmatmul.bf16.gmra.mxu0 %v101
    %v196 = vpop.f32.mrf.mxu0
    %v197 = vadd.f32 0.0, %v196
    %v198 = vpop.f32.mrf.mxu0
    %v199 = vadd.f32 0.0, %v198
    %200 = vdwg.mxu0
    %v201 = vmax.f32 %v113, 0.0
    %v202 = vmax.f32 %v162, 0.0
    %v203 = vmax.f32 %v115, 0.0
    %v204 = vmax.f32 %v164, 0.0
    %v205 = vmax.f32 %v118, 0.0
    %v206 = vmax.f32 %v167, 0.0
    %v207 = vmax.f32 %v120, 0.0
    %v208 = vmax.f32 %v169, 0.0
    %v209 = vmax.f32 %v123, 0.0
    %v210 = vmax.f32 %v172, 0.0
    %v211 = vmax.f32 %v125, 0.0
    %v212 = vmax.f32 %v174, 0.0
    %v213 = vmax.f32 %v128, 0.0
    %v214 = vmax.f32 %v177, 0.0
    %v215 = vmax.f32 %v130, 0.0
    %v216 = vmax.f32 %v179, 0.0
    %v217 = vmax.f32 %v133, 0.0
    %v218 = vmax.f32 %v182, 0.0
    %v219 = vmax.f32 %v135, 0.0
    %v220 = vmax.f32 %v184, 0.0
    %v221 = vmax.f32 %v138, 0.0
    %v222 = vmax.f32 %v187, 0.0
    %v223 = vmax.f32 %v140, 0.0
    %v224 = vmax.f32 %v189, 0.0
    %v225 = vmax.f32 %v143, 0.0
    %v226 = vmax.f32 %v192, 0.0
    %v227 = vmax.f32 %v145, 0.0
    %v228 = vmax.f32 %v194, 0.0
    %v229 = vmax.f32 %v148, 0.0
    %v230 = vmax.f32 %v197, 0.0
    %v231 = vmax.f32 %v150, 0.0
    %v232 = vmax.f32 %v199, 0.0
    %v233 = vld [vmem:[%s2] sm:$0xf]
    %v234 = vld [vmem:[%s2 + $0x4] sm:$0xf]
    %v235 = vpack.c.bf16 %v203, %v201
    %v236 = vpack.c.bf16 %v204, %v202
    %v237 = vpack.c.bf16 %v207, %v205
    %v238 = vpack.c.bf16 %v208, %v206
    %v239 = vpack.c.bf16 %v211, %v209
    %v240 = vpack.c.bf16 %v212, %v210
    %v241 = vpack.c.bf16 %v215, %v213
    %v242 = vpack.c.bf16 %v216, %v214
    %v243 = vpack.c.bf16 %v219, %v217
    %v244 = vpack.c.bf16 %v220, %v218
    %v245 = vpack.c.bf16 %v223, %v221
    %v246 = vpack.c.bf16 %v224, %v222
    %v247 = vpack.c.bf16 %v227, %v225
    %v248 = vpack.c.bf16 %v228, %v226
    %v249 = vpack.c.bf16 %v231, %v229
    %v250 = vpack.c.bf16 %v232, %v230
    %v253 = vunpack.c.l.b16 %v233
    %v254 = vunpack.c.l.b16 %v234
    %v255 = vpack.c.b16 %v254, %v253
    %257 = vmatpush.bf16.msra.mxu0 %v249
    %258 = vmatpush.bf16.msra.mxu0 %v247
    %259 = vmatpush.bf16.msra.mxu0 %v245
    %260 = vmatpush.bf16.msra.mxu0 %v243
    %261 = vmatpush.bf16.msra.mxu0 %v241
    %262 = vmatpush.bf16.msra.mxu0 %v239
    %263 = vmatpush.bf16.msra.mxu0 %v237
    %264 = vmatpush.bf16.msra.mxu0 %v235
    %265 = vmatmul.bf16.gmra.mxu0 %v255
    %v266 = vpop.f32.mrf.mxu0
    %v267 = vadd.f32 %v16, %v266
    %v268 = vpop.f32.mrf.mxu0
    %v269 = vadd.f32 %v18, %v268
    %270 = vdwg.mxu0
    %271 = vmatpush.bf16.msra.mxu0 %v250
    %272 = vmatpush.bf16.msra.mxu0 %v248
    %273 = vmatpush.bf16.msra.mxu0 %v246
    %274 = vmatpush.bf16.msra.mxu0 %v244
    %275 = vmatpush.bf16.msra.mxu0 %v242
    %276 = vmatpush.bf16.msra.mxu0 %v240
    %277 = vmatpush.bf16.msra.mxu0 %v238
    %278 = vmatpush.bf16.msra.mxu0 %v236
    %279 = vmatmul.bf16.gmra.mxu0 %v255
    %v280 = vpop.f32.mrf.mxu0
    %v281 = vadd.f32 %v17, %v280
    %v282 = vpop.f32.mrf.mxu0
    %v283 = vadd.f32 %v19, %v282
    %284 = vdwg.mxu0
    %v285 = vadd.f32 %v267, %v269
    %v286 = vrot.slane %v285, 4
    %v287 = vadd.f32 %v285, %v286
    %v288 = vrot.slane %v287, 2
    %v289 = vadd.f32 %v287, %v288
    %v290 = vrot.slane %v289, 1
    %v291 = vadd.f32 %v289, %v290
    %v292 = vadd.f32 %v281, %v283
    %v293 = vrot.slane %v292, 4
    %v294 = vadd.f32 %v292, %v293
    %v295 = vrot.slane %v294, 2
    %v296 = vadd.f32 %v294, %v295
    %v297 = vrot.slane %v296, 1
    %v298 = vadd.f32 %v296, %v297
    %v299 = vrcp.pop 16.0
    %v300 = vmul.f32 16.0, %v299
    %v301 = vsub.f32 1.0, %v300
    %v302 = vmul.f32 %v299, %v301
    %v303 = vadd.f32 %v299, %v302
    %vm304 = vweird.f32 %v299
    %v305 = vsel %vm304, %v299, %v303
    %v306 = vmul.f32 %v291, %v305
    %v307 = vmul.f32 %v298, %v305
    %v308 = vsub.f32 %v267, %v306
    %v309 = vsub.f32 %v281, %v307
    %v310 = vsub.f32 %v269, %v306
    %v311 = vsub.f32 %v283, %v307
    %v312 = vmul.f32 %v308, %v308
    %v313 = vmul.f32 %v309, %v309
    %v314 = vmul.f32 %v310, %v310
    %v315 = vmul.f32 %v311, %v311
    %v316 = vadd.f32 %v312, %v314
    %v317 = vrot.slane %v316, 4
    %v318 = vadd.f32 %v316, %v317
    %v319 = vrot.slane %v318, 2
    %v320 = vadd.f32 %v318, %v319
    %v321 = vrot.slane %v320, 1
    %v322 = vadd.f32 %v320, %v321
    %v323 = vadd.f32 %v313, %v315
    %v324 = vrot.slane %v323, 4
    %v325 = vadd.f32 %v323, %v324
    %v326 = vrot.slane %v325, 2
    %v327 = vadd.f32 %v325, %v326
    %v328 = vrot.slane %v327, 1
    %v329 = vadd.f32 %v327, %v328
    %v330 = vmul.f32 %v322, %v305
    %v331 = vmul.f32 %v329, %v305
    %v332 = vadd.f32 %v330, 1e-05
    %v333 = vadd.f32 %v331, 1e-05
    %v334 = vrsqrt.pop %v332
    %v335 = vmul.f32 %v334, %v332
    %v336 = vmul.f32 %v335, %v334
    %v337 = vmul.f32 0.5, %v336
    %v338 = vsub.f32 1.5, %v337
    %v339 = vmul.f32 %v334, %v338
    %vm340 = vweird.f32 %v332
    %vm341 = vweird.f32 %v334
    %vm342 = vmor %vm340, %vm341
    %v343 = vsel %vm342, %v334, %v339
    %v344 = vrsqrt.pop %v333
    %v345 = vmul.f32 %v344, %v333
    %v346 = vmul.f32 %v345, %v344
    %v347 = vmul.f32 0.5, %v346
    %v348 = vsub.f32 1.5, %v347
    %v349 = vmul.f32 %v344, %v348
    %vm350 = vweird.f32 %v333
    %vm351 = vweird.f32 %v344
    %vm352 = vmor %vm350, %vm351
    %v353 = vsel %vm352, %v344, %v349
    %v354 = vmul.f32 %v308, %v343
    %v355 = vmul.f32 %v309, %v353
    %v356 = vmul.f32 %v310, %v343
    %v357 = vmul.f32 %v311, %v353
    %358 = vst [vmem:[#allocation2] sm:$0xff] %v354
    %359 = vst [vmem:[#allocation2 + $0x8] sm:$0xff] %v355
    %360 = vst [vmem:[#allocation2 + $0x10] sm:$0xff] %v356
    %361 = vst [vmem:[#allocation2 + $0x18] sm:$0xff] %v357
    // Predicated region
    $region14: #{tpu_custom_call.1} parent=1 // pred_check
      _
    $region15: #{tpu_custom_call.1} parent=1 // pred_check_branch
      %363 = sbr.rel (0) target = $region17
    $region16: #{tpu_custom_call.1} parent=1 // pred_region
      %365 = vsyncadd [#allocation3], 0
      %s366 = sshll.u32 [#allocation2], 4
      %s367 = int_to_ptr.vmem [resolvable:$true] %s366
      %s368 = sshll.u32 %s3, 4
      %s369 = int_to_ptr.hbm [resolvable:$true] %s368
      %374 = dma.vmem_to_hbm [thread:$0]  %s367, 512, %s369, [#allocation3], 256, 256, 16
    $region17: #{tpu_custom_call.1} parent=1 // pred_fallthru
      _
    // Predicated region
    $region18: #{tpu_custom_call.1} parent=1 // pred_check
      _
    $region19: #{tpu_custom_call.1} parent=1 // pred_check_branch
      %376 = sbr.rel (0) target = $region21
    $region20: #{tpu_custom_call.1} parent=1 // pred_region
      %378 = dma.done [#allocation3], 512
    $region21: #{tpu_custom_call.1} parent=1 // pred_fallthru
      _
    %379 = vsyncpa [#allocation3], 1

</llo_original>
